<compile_context>
chip_gen: v7x
topology: tpu7x:2x2x1
jax: 0.10.0
libtpu: 0.0.40
codegen_flags: <defaults>
</compile_context>

<pallas_src>
import functools

import jax
import jax.numpy as jnp
from jax.experimental import pallas as pl
from jax.experimental.pallas import tpu as pltpu

QMIN = -134217728.0   # -2**27
QMAX = 134217727.0    #  2**27 - 1

_LANE_W = 1024          # lane-dense width (multiple of 128) -> unmasked vst, big DMAs
_MAX_BLOCK_ROWS = 256   # (256, 1024) f32 = 1 MiB per pipeline buffer


def _tile_params(n: int):
    """Choose (padded_rows, block_rows) for a flat length-n array laid out as
    (rows, _LANE_W).  block_rows is a multiple of 8; padded_rows is a multiple
    of block_rows."""
    rows = -(-n // _LANE_W)
    rows8 = -(-rows // 8) * 8
    block_rows = min(_MAX_BLOCK_ROWS, rows8)
    rows_padded = -(-rows8 // block_rows) * block_rows
    return rows_padded, block_rows


def _make_kernel(*, has_v, need_scale, quantize_v, fakequant_v, clamp_out,
                 v_const, out_dtype):
    """Build the elementwise kernel, specialized at trace time on the mode
    flags (they are Python-level booleans in the PyTorch module, so
    compile-time branching matches the reference semantics)."""

    def compute(x, v, s):
        x = x.astype(jnp.float32)
        if has_v:
            v = v.astype(jnp.float32)          # quantize at full precision
            if quantize_v:
                # v.mul(scale).round().clamp(-2**27, 2**27-1)
                v = jnp.clip(jnp.round(v * s), QMIN, QMAX)
            elif fakequant_v:
                # FakeQuantizeINT28 forward: round(v*s).clamp(INT28) / s
                v = jnp.clip(jnp.round(v * s), QMIN, QMAX) / s
        else:
            v = jnp.float32(v_const)           # fused compile-time constant
        out = x + v
        if clamp_out:
            out = jnp.clip(out, QMIN, QMAX)
        return out.astype(out_dtype)

    if need_scale:
        # scalar-prefetched scale lands in SMEM and is passed first.
        def kernel(scale_ref, x_ref, v_ref, o_ref):
            o_ref[...] = compute(x_ref[...], v_ref[...], scale_ref[0])
    elif has_v:
        def kernel(x_ref, v_ref, o_ref):
            o_ref[...] = compute(x_ref[...], v_ref[...], None)
    else:
        def kernel(x_ref, o_ref):
            o_ref[...] = compute(x_ref[...], None, None)
    return kernel


@functools.partial(
    jax.jit,
    static_argnames=("quantize_v", "fakequant_v", "clamp_out", "v_const", "out_dtype"))
def _accumulate_pallas(x, v, scale, *, quantize_v=False, fakequant_v=False,
                       clamp_out=False, v_const=0.0, out_dtype=jnp.float32):
    """out = (optionally clamp)( x + (optionally (fake-)quantized) v ), elementwise.
    If v is None, v is the compile-time constant `v_const`."""
    orig_shape = x.shape
    n = x.size
    has_v = v is not None
    need_scale = quantize_v or fakequant_v
    out_dtype = jnp.dtype(out_dtype)

    rows_padded, block_rows = _tile_params(n)
    total = rows_padded * _LANE_W
    pad = total - n

    def prep(a):
        flat = a.reshape(-1)
        if pad:                              # static Python check -> no-op when aligned
            flat = jnp.pad(flat, (0, pad))
        return flat.reshape(rows_padded, _LANE_W)

    inputs = [prep(x)]
    if has_v:
        inputs.append(prep(v))               # native dtype; kernel upcasts to f32

    grid = (rows_padded // block_rows,)

    if need_scale:
        def mk_spec():
            return pl.BlockSpec((block_rows, _LANE_W), lambda i, s: (i, 0))
    else:
        def mk_spec():
            return pl.BlockSpec((block_rows, _LANE_W), lambda i: (i, 0))

    kernel = _make_kernel(
        has_v=has_v, need_scale=need_scale, quantize_v=quantize_v,
        fakequant_v=fakequant_v, clamp_out=clamp_out,
        v_const=float(v_const), out_dtype=out_dtype)

    bytes_accessed = sum(int(a.size) * a.dtype.itemsize for a in inputs)
    bytes_accessed += total * out_dtype.itemsize
    cost = pl.CostEstimate(flops=total, transcendentals=0,
                           bytes_accessed=bytes_accessed)

    grid_spec = pltpu.PrefetchScalarGridSpec(
        num_scalar_prefetch=1 if need_scale else 0,
        grid=grid,
        in_specs=[mk_spec() for _ in inputs],
        out_specs=mk_spec(),
    )

    call_args = tuple(inputs)
    if need_scale:
        call_args = (jnp.asarray(scale, jnp.float32).reshape(1),) + call_args

    out = pl.pallas_call(
        kernel,
        out_shape=jax.ShapeDtypeStruct((rows_padded, _LANE_W), out_dtype),
        grid_spec=grid_spec,
        compiler_params=pltpu.CompilerParams(
            dimension_semantics=("parallel",)),
        cost_estimate=cost,
    )(*call_args)

    out_flat = out.reshape(-1)
    if pad:
        out_flat = out_flat[:n]
    return out_flat.reshape(orig_shape)


class QAccumulate:
    """JAX/Pallas port of hnn.snn.accumulate.QAccumulate (forward pass only).

    Mode flags mirror the PyTorch module's Python-level attributes; the
    quantize / fake-quantize / clamp math is fused into a single kernel pass.
    """

    def __init__(self, v_init: float) -> None:
        self.v_init = float(v_init)
        self.weight_scale = None
        self.first_time = True
        self.pretrained = False
        self.freeze = False
        self.quantization_mode = False
        self.aware_mode = False

    # ---- mode switches (mirror QModule) ----
    def quantize(self):
        self.quantization_mode = True
        self.aware_mode = False

    def dequantize(self):
        self.quantization_mode = False
        self.v_init = self.v_init / float(self.weight_scale)

    def aware(self, weight_scale=None):
        if weight_scale is not None:
            self.weight_scale = weight_scale
        if self.quantization_mode:
            self.dequantize()
        self.aware_mode = True
        self.quantization_mode = False
        ws = float(self.weight_scale)
        self.v_init = round(self.v_init * ws) / ws

    # ---- forward ----
    def __call__(self, x, weight_scale, v=None):
        self.weight_scale = weight_scale
        quantize_v = False
        fakequant_v = False
        clamp_out = False

        if self.quantization_mode:
            assert not self.aware_mode, \
                'Quantization mode and QAT mode are mutual exclusive'
            clamp_out = True
            if self.first_time:
                self.first_time = False
                if not self.pretrained and not self.freeze:
                    # round(v_init * weight_scale.item())  (host-side scalar, as in PyTorch)
                    self.v_init = float(round(self.v_init * float(weight_scale)))
                if v is not None:
                    quantize_v = True

        if self.aware_mode:
            assert not self.quantization_mode, \
                'Quantization mode and QAT mode are mutual exclusive'
            if v is not None:
                # FakeQuantizeINT28 forward, fused into the kernel.
                # TODO(synk): the straight-through-estimator backward of
                # FakeQuantizeINT28 is not implemented (forward only).
                fakequant_v = True

        if v is None:
            # Fused constant add: out = x + v_init (no full_like HBM pass).
            out_dtype = jnp.dtype(jnp.float32) if clamp_out else jnp.dtype(x.dtype)
            return _accumulate_pallas(
                x, None, None,
                quantize_v=False, fakequant_v=False, clamp_out=clamp_out,
                v_const=float(self.v_init), out_dtype=out_dtype)

        # Quantization mode produces INT28-range values -> keep them in f32
        # (bf16/fp16 cannot represent them exactly; see perf/correctness review).
        if clamp_out or quantize_v:
            out_dtype = jnp.dtype(jnp.float32)
        else:
            out_dtype = jnp.promote_types(x.dtype, v.dtype)

        scale = weight_scale if (quantize_v or fakequant_v) else None
        return _accumulate_pallas(
            x, v, scale,
            quantize_v=quantize_v, fakequant_v=fakequant_v, clamp_out=clamp_out,
            v_const=0.0, out_dtype=out_dtype)


if __name__ == "__main__":
    key = jax.random.PRNGKey(0)
    kx, kv = jax.random.split(key)

    # NCHW input, as produced by the upstream conv layers.
    x = jax.random.normal(kx, (2, 4, 16, 16), dtype=jnp.float32)
    v_in = jax.random.normal(kv, (2, 4, 16, 16), dtype=jnp.float32) * 3.0
    weight_scale = jnp.float32(2.0)

    # --- default (float) mode, v=None: out = x + v_init ---
    mod = QAccumulate(v_init=0.5)
    out0 = jax.block_until_ready(mod(x, weight_scale))
    assert jnp.allclose(out0, x + 0.5, atol=1e-6), "float-mode (v=None) mismatch"

    # --- default (float) mode, v provided: out = x + v ---
    out1 = jax.block_until_ready(mod(x, weight_scale, v_in))
    assert jnp.allclose(out1, x + v_in, atol=1e-6), "float-mode (v) mismatch"

    # --- quantization mode, first_time, v provided ---
    qmod = QAccumulate(v_init=0.5)
    qmod.quantize()
    xq = jnp.round(x * 100.0)  # pretend-integer membrane increments
    out2 = jax.block_until_ready(qmod(xq, weight_scale, v_in))
    v_q = jnp.clip(jnp.round(v_in * weight_scale), QMIN, QMAX)
    ref2 = jnp.clip(xq + v_q, QMIN, QMAX)
    assert jnp.allclose(out2, ref2, atol=1e-6), "quant-mode mismatch"
    assert qmod.v_init == float(round(0.5 * 2.0)), "v_init quantization mismatch"

    # --- quantization mode, second step (no re-quantize, still clamped) ---
    out2b = jax.block_until_ready(qmod(xq, weight_scale, ref2))
    assert jnp.allclose(out2b, jnp.clip(xq + ref2, QMIN, QMAX), atol=1e-6), \
        "quant-mode (2nd step) mismatch"

    # --- aware (QAT) mode, v provided: out = x + fakequant(v) ---
    amod = QAccumulate(v_init=0.5)
    amod.aware(weight_scale)
    out3 = jax.block_until_ready(amod(x, weight_scale, v_in))
    ref3 = x + jnp.clip(jnp.round(v_in * weight_scale), QMIN, QMAX) / weight_scale
    assert jnp.allclose(out3, ref3, atol=1e-6), "aware-mode mismatch"

    print("KERNEL_OK")
</pallas_src>

<mosaic_0001>
module attributes {stable_mosaic.version = 11 : i64} {
  func.func @kernel(%arg0: i32, %arg1: memref<8x1024xf32, #tpu.memory_space<vmem>>, %arg2: memref<8x1024xf32, #tpu.memory_space<vmem>>) attributes {dimension_semantics = [#tpu.dimension_semantics<parallel>], iteration_bounds = array<i64: 1>, scalar_prefetch = 0 : i64, scratch_operands = 0 : i64, tpu.core_type = #tpu.core_type<tc>, window_params = [{transform_indices = @transform_0, window_bounds = array<i64: 8, 1024>}, {transform_indices = @transform_1, window_bounds = array<i64: 8, 1024>}]} {
    %c0 = arith.constant 0 : index
    %c0_0 = arith.constant 0 : index
    %0 = vector.load %arg1[%c0, %c0_0] : memref<8x1024xf32, #tpu.memory_space<vmem>>, vector<8x1024xf32>
    %cst = arith.constant 5.000000e-01 : f32
    %1 = vector.broadcast %cst : f32 to vector<8x1024xf32>
    %2 = arith.addf %0, %1 : vector<8x1024xf32>
    %c0_1 = arith.constant 0 : index
    %c0_2 = arith.constant 0 : index
    %3 = vector.load %arg2[%c0_1, %c0_2] : memref<8x1024xf32, #tpu.memory_space<vmem>>, vector<8x1024xf32>
    tpu.vector_store %arg2[%c0_1, %c0_2], %2 {strides = array<i32>} : memref<8x1024xf32, #tpu.memory_space<vmem>>, vector<8x1024xf32>,
    return
  }
  func.func @transform_0(%arg0: i32) -> (i32, i32) {
    %c0_i32 = arith.constant 0 : i32
    %c0_i32_0 = arith.constant 0 : i32
    return %arg0, %c0_i32 : i32, i32
  }
  func.func @transform_1(%arg0: i32) -> (i32, i32) {
    %c0_i32 = arith.constant 0 : i32
    %c0_i32_0 = arith.constant 0 : i32
    return %arg0, %c0_i32 : i32, i32
  }
}

</mosaic_0001>

<llo_original>
// kernel: _accumulate_pallas.1
$region0: #{_accumulate_pallas.1}
  #allocation0 [shape = 'u32[]', space=smem, size = 0x4, offset = 0x4, fixed_abs, tag = 'smem constant byte address 0x4 - core index']
  #allocation1 [shape = 'u32[144,128]{1,0:T(1,128)}', space=vmem, size = 0x12000, scoped, tag = 'internal scratch']
  %s0 = inlined_call_operand.vmem [shape: f32[8,1024], index: 0, kind: input, shape index: {}]
  %s1 = inlined_call_operand.vmem [shape: f32[8,1024], index: 1, kind: output, shape index: {}]
  %s2 = sld [smem:[#allocation0]]
  $region14: #{_accumulate_pallas.1} parent=0
    _
  %s4 = ssub.s32 1, %s2
  %s5 = scalar_select 0, %s4, %s2
  // Predicated region
  $region2: #{_accumulate_pallas.1} parent=0 // pred_check
    _
  $region3: #{_accumulate_pallas.1} parent=0 // pred_check_branch
    %7 = sbr.rel (0) target = $region5
  $region4: #{_accumulate_pallas.1} parent=0 // pred_region
    _
  $region5: #{_accumulate_pallas.1} parent=0 // pred_fallthru
    _
  %v8 = vld [vmem:[%s0] sm:$0xff]
  %v9 = vld [vmem:[%s0 + $0x8] sm:$0xff]
  %v10 = vld [vmem:[%s0 + $0x10] sm:$0xff]
  %v11 = vld [vmem:[%s0 + $0x18] sm:$0xff]
  %v12 = vld [vmem:[%s0 + $0x20] sm:$0xff]
  %v13 = vld [vmem:[%s0 + $0x28] sm:$0xff]
  %v14 = vld [vmem:[%s0 + $0x30] sm:$0xff]
  %v15 = vld [vmem:[%s0 + $0x38] sm:$0xff]
  %v16 = vadd.f32 %v8, 0.5
  %v17 = vadd.f32 %v9, 0.5
  %v18 = vadd.f32 %v10, 0.5
  %v19 = vadd.f32 %v11, 0.5
  %v20 = vadd.f32 %v12, 0.5
  %v21 = vadd.f32 %v13, 0.5
  %v22 = vadd.f32 %v14, 0.5
  %v23 = vadd.f32 %v15, 0.5
  %24 = vst [vmem:[%s1] sm:$0xff] %v16
  %25 = vst [vmem:[%s1 + $0x8] sm:$0xff] %v17
  %26 = vst [vmem:[%s1 + $0x10] sm:$0xff] %v18
  %27 = vst [vmem:[%s1 + $0x18] sm:$0xff] %v19
  %28 = vst [vmem:[%s1 + $0x20] sm:$0xff] %v20
  %29 = vst [vmem:[%s1 + $0x28] sm:$0xff] %v21
  %30 = vst [vmem:[%s1 + $0x30] sm:$0xff] %v22
  %31 = vst [vmem:[%s1 + $0x38] sm:$0xff] %v23
  // Predicated region
  $region6: #{_accumulate_pallas.1} parent=0 // pred_check
    _
  $region7: #{_accumulate_pallas.1} parent=0 // pred_check_branch
    %33 = sbr.rel (0) target = $region9
  $region8: #{_accumulate_pallas.1} parent=0 // pred_region
    _
  $region9: #{_accumulate_pallas.1} parent=0 // pred_fallthru
    _
  // Predicated region
  $region10: #{_accumulate_pallas.1} parent=0 // pred_check
    _
  $region11: #{_accumulate_pallas.1} parent=0 // pred_check_branch
    %35 = sbr.rel (0) target = $region13
  $region12: #{_accumulate_pallas.1} parent=0 // pred_region
    _
  $region13: #{_accumulate_pallas.1} parent=0 // pred_fallthru
    _

</llo_original>
